<compile_context>
chip_gen: v6e
topology: v6e:2x2x1
jax: 0.10.0
libtpu: 0.0.40
codegen_flags: <defaults>
</compile_context>

<pallas_src>
import jax
import jax.numpy as jnp
from jax.experimental import pallas as pl
from jax.experimental.pallas import tpu as pltpu


def dagma_mlp_kernel(xT_ref, w1_ref, maskw2_ref, b2_ref, oT_ref):
    # Per grid step:
    #   xT_ref     : (k_pad, bn)   bf16  [x.T ; ones ; 0-pad], batch in lanes
    #   w1_ref     : (d*m1, k_pad) bf16  [fc1.weight | fc1.bias | 0-pad] (resident)
    #   maskw2_ref : (d, d*m1)     bf16  block-diag mask * w2, folded (resident)
    #   b2_ref     : (d, 1)        f32   (resident)
    #   oT_ref     : (d, bn)       f32   output tile (transposed), batch in lanes
    #
    # fc1 + bias (folded): (d*m1, k_pad) @ (k_pad, bn) -> (d*m1, bn), f32 acc.
    h = jnp.dot(w1_ref[...], xT_ref[...], preferred_element_type=jnp.float32)
    z = jax.nn.sigmoid(h)                                   # EUP, f32
    # LocallyConnected(d, m1, 1): per-group scale + segmented sum as one small
    # MXU matmul against the precomputed (mask * w2) operand.
    out = jnp.dot(maskw2_ref[...], z.astype(jnp.bfloat16),
                  preferred_element_type=jnp.float32)       # (d, bn)
    oT_ref[...] = (out + b2_ref[...]).astype(oT_ref.dtype)


def _pick_block_n(n: int) -> int:
    """Lane-dense multiple of 128; large for single-TC amortization but >= 2
    grid steps when n allows, so v7x's two TensorCores both get work."""
    if n <= 128:
        return n
    if n < 256:
        return 128                       # 2 steps (last one padded; harmless)
    return min(512, max(128, ((n // 2) // 128) * 128))


def dagma_mlp_forward(x, w1, b1, w2, b2, *, block_n=None):
    """
    x  : (n, d)        input data
    w1 : (d*m1, d)     fc1.weight  (PyTorch Linear layout: (out, in))
    b1 : (d*m1,)       fc1.bias
    w2 : (d, m1, 1)    LocallyConnected.weight
    b2 : (d, 1)        LocallyConnected.bias
    returns (n, d) float32
    """
    n, d = x.shape
    dm1 = w1.shape[0]
    m1 = dm1 // d
    assert dm1 == d * m1

    if block_n is None:
        block_n = _pick_block_n(n)
    block_n = min(block_n, n)
    grid = (pl.cdiv(n, block_n),)

    # ---- Wrapper-side layout plumbing (plain JAX) -------------------------
    # fc1 bias fold: K goes d -> d+1 (ones row in x.T / b1 column in W1),
    # zero-padded to a multiple of 8 so the x tile's second-minor dim is
    # sublane-aligned.
    k_pad = ((d + 1 + 7) // 8) * 8

    xT = jnp.concatenate(
        [x.T.astype(jnp.bfloat16),
         jnp.ones((1, n), jnp.bfloat16),
         jnp.zeros((k_pad - d - 1, n), jnp.bfloat16)], axis=0)      # (k_pad, n)

    w1_aug = jnp.concatenate(
        [w1.astype(jnp.bfloat16),
         b1.reshape(dm1, 1).astype(jnp.bfloat16),
         jnp.zeros((dm1, k_pad - d - 1), jnp.bfloat16)], axis=1)    # (dm1, k_pad)

    # LocallyConnected weight folded into the 0/1 block-diagonal row-sum mask:
    # mask_w2[j, j*m1 + m] = w2[j, m, 0], zero elsewhere.  Built once here, so
    # no d^2*m1 compute or (d*m1, bn) multiply per grid step in the kernel.
    row = jnp.arange(d, dtype=jnp.int32)[:, None]
    col = jnp.arange(dm1, dtype=jnp.int32)[None, :]
    mask_w2 = jnp.where(col // m1 == row,
                        w2.reshape(dm1).astype(jnp.float32)[None, :],
                        0.0).astype(jnp.bfloat16)                   # (d, dm1)

    b2c = b2.reshape(d, 1).astype(jnp.float32)                      # (d, 1)

    # ---- VMEM budget guard (v7x has only 64 MiB physical VMEM) ------------
    vmem_limit = 32 * 1024 * 1024
    resident = w1_aug.size * 2 + mask_w2.size * 2 + b2c.size * 4
    per_step = 2 * (k_pad * block_n * 2 + d * block_n * 4)   # double-buffered tiles
    interm = 2 * dm1 * block_n * 4                           # h / z f32 temporaries
    assert resident + per_step + interm < int(0.75 * vmem_limit), (
        "DagmaMLP Pallas kernel: resident weights + tiles exceed the VMEM "
        "budget; for large d, block W1/mask_w2 over the d*m1 axis with an "
        "extra 'arbitrary' grid axis and an f32 accumulator.")
    # TODO(synk): blocked/accumulator fallback over d*m1 for very large graphs.

    cost = pl.CostEstimate(
        flops=2 * n * dm1 * k_pad + 2 * n * d * dm1,   # fc1 matmul + mask matmul
        transcendentals=n * dm1,                       # sigmoid
        bytes_accessed=(xT.size * 2 + w1_aug.size * 2 + mask_w2.size * 2
                        + b2c.size * 4 + n * d * 4),
    )

    outT = pl.pallas_call(
        dagma_mlp_kernel,
        out_shape=jax.ShapeDtypeStruct((d, n), jnp.float32),
        grid=grid,
        in_specs=[
            # x tile: pipelined (double-buffered) over the batch axis.
            pl.BlockSpec((k_pad, block_n), lambda i: (0, i)),
            # Grid-invariant operands: single VMEM-resident copy, no pipeline.
            pl.BlockSpec(memory_space=pltpu.MemorySpace.VMEM),   # [W1 | b1] bf16
            pl.BlockSpec(memory_space=pltpu.MemorySpace.VMEM),   # mask * w2 bf16
            pl.BlockSpec(memory_space=pltpu.MemorySpace.VMEM),   # b2 f32
        ],
        out_specs=pl.BlockSpec((d, block_n), lambda i: (0, i)),
        compiler_params=pltpu.CompilerParams(
            dimension_semantics=("parallel",),     # shard grid steps across TCs
            vmem_limit_bytes=vmem_limit,           # explicit, v7x-safe budget
        ),
        cost_estimate=cost,
    )(xT, w1_aug, mask_w2, b2c)

    # Layout plumbing back to (n, d); keep f32 output for accuracy.
    return outT.T


def dagma_mlp_reference(x, w1, b1, w2, b2):
    """Pure-JAX (f32) reference mirroring the PyTorch forward exactly."""
    n, d = x.shape
    m1 = w1.shape[0] // d
    h = x @ w1.T + b1                                   # fc1
    z = jax.nn.sigmoid(h.reshape(n, d, m1))             # view + sigmoid
    out = jnp.einsum("ndm,dmo->ndo", z, w2) + b2[None, :, :]
    return out[:, :, 0]                                 # squeeze(dim=2)


if __name__ == "__main__":
    # dims = [d, m1, 1]  (DagmaMLP with one hidden layer per structural eq.)
    d, m1, n = 8, 16, 256
    key = jax.random.PRNGKey(0)
    k1, k2, k3, k4, k5 = jax.random.split(key, 5)

    x = jax.random.normal(k1, (n, d), dtype=jnp.float32)
    # Note: PyTorch __init__ zero-inits fc1 (degenerate all-equal output); use
    # random init so the kernel compute is actually exercised.
    w1 = 0.1 * jax.random.normal(k2, (d * m1, d), dtype=jnp.float32)   # fc1.weight
    b1 = 0.1 * jax.random.normal(k3, (d * m1,), dtype=jnp.float32)     # fc1.bias
    w2 = 0.1 * jax.random.normal(k4, (d, m1, 1), dtype=jnp.float32)    # LocallyConnected.weight
    b2 = 0.1 * jax.random.normal(k5, (d, 1), dtype=jnp.float32)        # LocallyConnected.bias

    out = dagma_mlp_forward(x, w1, b1, w2, b2)
    out = jax.block_until_ready(out)

    ref = dagma_mlp_reference(x, w1, b1, w2, b2)
    assert out.shape == (n, d)
    # bf16 MXU operands (and PyTorch's float64 baseline) => loosened tolerance.
    assert jnp.allclose(out, ref, atol=2e-2, rtol=2e-2), "mismatch vs reference"

    # TODO(synk): h_func (slogdet acyclicity), fc1_l1_reg and fc1_to_adj are
    # host-side analysis ops with no clean Pallas equivalent (slogdet); keep
    # them in plain JAX/NumPy.
    print("KERNEL_OK")
</pallas_src>

<mosaic_0001>
module attributes {stable_mosaic.version = 11 : i64} {
  func.func @dagma_mlp_kernel(%arg0: i32, %arg1: memref<16x128xbf16, #tpu.memory_space<vmem>>, %arg2: memref<128x16xbf16, #tpu.memory_space<vmem>>, %arg3: memref<8x128xbf16, #tpu.memory_space<vmem>>, %arg4: memref<8x1xf32, #tpu.memory_space<vmem>>, %arg5: memref<8x128xf32, #tpu.memory_space<vmem>>) attributes {dimension_semantics = [#tpu.dimension_semantics<parallel>], iteration_bounds = array<i64: 2>, scalar_prefetch = 0 : i64, scratch_operands = 0 : i64, tpu.core_type = #tpu.core_type<tc>, window_params = [{transform_indices = @transform_0, window_bounds = array<i64: 16, 128>}, {pipeline_mode = #tpu.pipeline_mode<synchronous>, transform_indices = @transform_1, window_bounds = array<i64: 128, 16>}, {pipeline_mode = #tpu.pipeline_mode<synchronous>, transform_indices = @transform_2, window_bounds = array<i64: 8, 128>}, {pipeline_mode = #tpu.pipeline_mode<synchronous>, transform_indices = @transform_3, window_bounds = array<i64: 8, 1>}, {transform_indices = @transform_4, window_bounds = array<i64: 8, 128>}]} {
    %c0 = arith.constant 0 : index
    %c0_0 = arith.constant 0 : index
    %0 = vector.load %arg2[%c0, %c0_0] : memref<128x16xbf16, #tpu.memory_space<vmem>>, vector<128x16xbf16>
    %c0_1 = arith.constant 0 : index
    %c0_2 = arith.constant 0 : index
    %1 = vector.load %arg1[%c0_1, %c0_2] : memref<16x128xbf16, #tpu.memory_space<vmem>>, vector<16x128xbf16>
    %cst = arith.constant dense<0.000000e+00> : vector<128x128xf32>
    %2 = tpu.matmul %0, %1, %cst {dimension_numbers = #tpu.dot_dimension_numbers<[1], [0], [0], [1], [0, 0, 1, 1], [], []>} : vector<128x16xbf16>, vector<16x128xbf16>, vector<128x128xf32> -> vector<128x128xf32>
    %3 = arith.negf %2 : vector<128x128xf32>
    %4 = math.exp %3 : vector<128x128xf32>
    %cst_3 = arith.constant 1.000000e+00 : f32
    %5 = vector.broadcast %cst_3 : f32 to vector<128x128xf32>
    %6 = arith.addf %5, %4 : vector<128x128xf32>
    %7 = arith.divf %5, %6 : vector<128x128xf32>
    %c0_4 = arith.constant 0 : index
    %c0_5 = arith.constant 0 : index
    %8 = vector.load %arg3[%c0_4, %c0_5] : memref<8x128xbf16, #tpu.memory_space<vmem>>, vector<8x128xbf16>
    %9 = arith.truncf %7 : vector<128x128xf32> to vector<128x128xbf16>
    %cst_6 = arith.constant dense<0.000000e+00> : vector<8x128xf32>
    %10 = tpu.matmul %8, %9, %cst_6 {dimension_numbers = #tpu.dot_dimension_numbers<[1], [0], [0], [1], [0, 0, 1, 1], [], []>} : vector<8x128xbf16>, vector<128x128xbf16>, vector<8x128xf32> -> vector<8x128xf32>
    %c0_7 = arith.constant 0 : index
    %c0_8 = arith.constant 0 : index
    %11 = vector.load %arg4[%c0_7, %c0_8] : memref<8x1xf32, #tpu.memory_space<vmem>>, vector<8x1xf32>
    %12 = vector.broadcast %11 : vector<8x1xf32> to vector<8x128xf32>
    %13 = arith.addf %10, %12 : vector<8x128xf32>
    %c0_9 = arith.constant 0 : index
    %c0_10 = arith.constant 0 : index
    %14 = vector.load %arg5[%c0_9, %c0_10] : memref<8x128xf32, #tpu.memory_space<vmem>>, vector<8x128xf32>
    tpu.vector_store %arg5[%c0_9, %c0_10], %13 {strides = array<i32>} : memref<8x128xf32, #tpu.memory_space<vmem>>, vector<8x128xf32>,
    return
  }
  func.func @transform_0(%arg0: i32) -> (i32, i32) {
    %c0_i32 = arith.constant 0 : i32
    %c0_i32_0 = arith.constant 0 : i32
    return %c0_i32, %arg0 : i32, i32
  }
  func.func @transform_1(%arg0: i32) -> (i32, i32) {
    %c0_i32 = arith.constant 0 : i32
    %c0_i32_0 = arith.constant 0 : i32
    %c0_i32_1 = arith.constant 0 : i32
    return %c0_i32, %c0_i32_0 : i32, i32
  }
  func.func @transform_2(%arg0: i32) -> (i32, i32) {
    %c0_i32 = arith.constant 0 : i32
    %c0_i32_0 = arith.constant 0 : i32
    %c0_i32_1 = arith.constant 0 : i32
    return %c0_i32, %c0_i32_0 : i32, i32
  }
  func.func @transform_3(%arg0: i32) -> (i32, i32) {
    %c0_i32 = arith.constant 0 : i32
    %c0_i32_0 = arith.constant 0 : i32
    %c0_i32_1 = arith.constant 0 : i32
    return %c0_i32, %c0_i32_0 : i32, i32
  }
  func.func @transform_4(%arg0: i32) -> (i32, i32) {
    %c0_i32 = arith.constant 0 : i32
    %c0_i32_0 = arith.constant 0 : i32
    return %c0_i32, %arg0 : i32, i32
  }
}

</mosaic_0001>

<llo_original>
// kernel: tpu_custom_call.1
$region0: #{tpu_custom_call.1}
  #allocation0 [shape = 'u32[]', space=smem, size = 0x4, offset = 0x4, fixed_abs, tag = 'smem constant byte address 0x4 - core index']
  #allocation1 [shape = 'u32[144,128]{1,0:T(1,128)}', space=vmem, size = 0x12000, scoped, tag = 'internal scratch']
  %s0 = inlined_call_operand.vmem [shape: bf16[16,256], index: 0, kind: input, shape index: {}]
  %s1 = inlined_call_operand.vmem [shape: bf16[128,16], index: 1, kind: input, shape index: {}]
  %s2 = inlined_call_operand.vmem [shape: bf16[8,128], index: 2, kind: input, shape index: {}]
  %s3 = inlined_call_operand.vmem [shape: f32[8,1], index: 3, kind: input, shape index: {}]
  %s4 = inlined_call_operand.hbm [shape: f32[8,256], index: 4, kind: output, shape index: {}]
  %s5 = sld [smem:[#allocation0]]
  $region90: #{tpu_custom_call.1} parent=0
    _
  %s7 = ssub.s32 1, %s5
  %s8 = scalar_select 0, %s7, %s5
  $region1: #{tpu_custom_call.1} parent=0
    #allocation2 [shape = 'u8[8192]{0}', space=vmem, size = 0x2000, scoped, tag = 'input window, operand 0']
    #allocation3 [shape = 'u8[8192]{0}', space=vmem, size = 0x2000, scoped, tag = 'output window, operand 0']
    #allocation4 [shape = 's32[2]{0}', space=sflag, size = 0x8, scoped, tag = 'scoped memory for tpu_custom_call.1']
    %9 = vsyncpa [#allocation4], 0
    %s10 = scalar_lea.sflag [#allocation4], 1
    %11 = vsyncpa %s10, 0
    loop: start=0, step=1, limit=4
    $region2: #{tpu_custom_call.1} parent=1 // loop_pre_header
      _
    $region3: #{tpu_custom_call.1} parent=1 // loop_header
      %s13 = sphi 0, %s17
      %p14 = scmp.ge.s32.totalorder %s13, 4
      %s23 = sphi 0, %s25
      %s26 = sphi 0, %s23
      %s27 = sphi 0, %s26
      %s43 = sphi 0, %s27
      %s47 = sphi 0, %s47
      %s49 = sphi 0, %s47
      %s50 = sphi 0, %s49
      %s64 = sphi 0, %s50
      %s68 = sphi 0, %s68
      %s70 = sphi 0, %s68
      %s71 = sphi 0, %s70
      %s85 = sphi 0, %s71
      %s89 = sphi 0, %s89
      %s91 = sphi 0, %s89
      %s92 = sphi 0, %s91
      %s106 = sphi 0, %s92
      %s112 = sphi 0, %s114
      %s115 = sphi 0, %s112
      %s116 = sphi 0, %s115
      %s132 = sphi 0, %s116
    $region4: #{tpu_custom_call.1} parent=1 // loop_header_branch
      %16 = sbr.rel (%p14) target = $region8
    $region5: #{tpu_custom_call.1} parent=1 // loop_body
      %s18 = ssub.s32 %s13, 1
      %s19 = ssub.s32 %s13, 2
      %s20 = sadd.s32 %s13, 1
      %s21 = ssub.s32 %s13, %s20
      %p22 = scmp.eq.s32.totalorder %s21, 0
      %s24 = sadd.s32 %s23, 1
      %s25 = scalar_select %p22, %s23, %s24
      %p28 = pneg %p22
      %p29 = scmp.eq.s32.totalorder %s13, 1
      %p30 = por %p28, %p29
      %p31 = scmp.ne.s32.totalorder %s23, %s26
      %p32 = scmp.eq.s32.totalorder %s13, 0
      %p33 = por %p31, %p32
      %p34 = scmp.ne.s32.totalorder %s23, %s26
      %p35 = scmp.eq.s32.totalorder %s18, 1
      %p36 = por %p34, %p35
      %p37 = scmp.ne.s32.totalorder %s26, %s27
      %p38 = scmp.eq.s32.totalorder %s18, 0
      %p39 = por %p37, %p38
      %p40 = scmp.ne.s32.totalorder %s26, %s27
      %p41 = scmp.eq.s32.totalorder %s19, 1
      %p42 = por %p40, %p41
      %p44 = scmp.ne.s32.totalorder %s27, %s43
      %p45 = scmp.eq.s32.totalorder %s19, 0
      %p46 = por %p44, %p45
      %s48 = sadd.s32 %s47, 1
      %p51 = scmp.eq.s32.totalorder %s13, 1
      %p52 = scmp.ne.s32.totalorder %s47, %s49
      %p53 = scmp.eq.s32.totalorder %s13, 0
      %p54 = por %p52, %p53
      %p55 = scmp.ne.s32.totalorder %s47, %s49
      %p56 = scmp.eq.s32.totalorder %s18, 1
      %p57 = por %p55, %p56
      %p58 = scmp.ne.s32.totalorder %s49, %s50
      %p59 = scmp.eq.s32.totalorder %s18, 0
      %p60 = por %p58, %p59
      %p61 = scmp.ne.s32.totalorder %s49, %s50
      %p62 = scmp.eq.s32.totalorder %s19, 1
      %p63 = por %p61, %p62
      %p65 = scmp.ne.s32.totalorder %s50, %s64
      %p66 = scmp.eq.s32.totalorder %s19, 0
      %p67 = por %p65, %p66
      %s69 = sadd.s32 %s68, 1
      %p72 = scmp.eq.s32.totalorder %s13, 1
      %p73 = scmp.ne.s32.totalorder %s68, %s70
      %p74 = scmp.eq.s32.totalorder %s13, 0
      %p75 = por %p73, %p74
      %p76 = scmp.ne.s32.totalorder %s68, %s70
      %p77 = scmp.eq.s32.totalorder %s18, 1
      %p78 = por %p76, %p77
      %p79 = scmp.ne.s32.totalorder %s70, %s71
      %p80 = scmp.eq.s32.totalorder %s18, 0
      %p81 = por %p79, %p80
      %p82 = scmp.ne.s32.totalorder %s70, %s71
      %p83 = scmp.eq.s32.totalorder %s19, 1
      %p84 = por %p82, %p83
      %p86 = scmp.ne.s32.totalorder %s71, %s85
      %p87 = scmp.eq.s32.totalorder %s19, 0
      %p88 = por %p86, %p87
      %s90 = sadd.s32 %s89, 1
      %p93 = scmp.eq.s32.totalorder %s13, 1
      %p94 = scmp.ne.s32.totalorder %s89, %s91
      %p95 = scmp.eq.s32.totalorder %s13, 0
      %p96 = por %p94, %p95
      %p97 = scmp.ne.s32.totalorder %s89, %s91
      %p98 = scmp.eq.s32.totalorder %s18, 1
      %p99 = por %p97, %p98
      %p100 = scmp.ne.s32.totalorder %s91, %s92
      %p101 = scmp.eq.s32.totalorder %s18, 0
      %p102 = por %p100, %p101
      %p103 = scmp.ne.s32.totalorder %s91, %s92
      %p104 = scmp.eq.s32.totalorder %s19, 1
      %p105 = por %p103, %p104
      %p107 = scmp.ne.s32.totalorder %s92, %s106
      %p108 = scmp.eq.s32.totalorder %s19, 0
      %p109 = por %p107, %p108
      %s110 = ssub.s32 %s13, %s20
      %p111 = scmp.eq.s32.totalorder %s110, 0
      %s113 = sadd.s32 %s112, 1
      %s114 = scalar_select %p111, %s112, %s113
      %p117 = pneg %p111
      %p118 = scmp.eq.s32.totalorder %s13, 1
      %p119 = por %p117, %p118
      %p120 = scmp.ne.s32.totalorder %s112, %s115
      %p121 = scmp.eq.s32.totalorder %s13, 0
      %p122 = por %p120, %p121
      %p123 = scmp.ne.s32.totalorder %s112, %s115
      %p124 = scmp.eq.s32.totalorder %s18, 1
      %p125 = por %p123, %p124
      %p126 = scmp.ne.s32.totalorder %s115, %s116
      %p127 = scmp.eq.s32.totalorder %s18, 0
      %p128 = por %p126, %p127
      %p129 = scmp.ne.s32.totalorder %s115, %s116
      %p130 = scmp.eq.s32.totalorder %s19, 1
      %p131 = por %p129, %p130
      %p133 = scmp.ne.s32.totalorder %s116, %s132
      %p134 = scmp.eq.s32.totalorder %s19, 0
      %p135 = por %p133, %p134
      %p136 = scmp.le.s32.totalorder 1, %s13
      %p137 = scmp.lt.s32.totalorder %s13, 3
      %p138 = pnand %p136, %p137
      %p139 = pneg %p138
      // Predicated region
      $region9: #{tpu_custom_call.1} parent=5 // pred_check
        _
      $region10: #{tpu_custom_call.1} parent=5 // pred_check_branch
        %141 = sbr.rel (%p138) target = $region12
      $region11: #{tpu_custom_call.1} parent=5 // pred_region
        %s142 = ssub.s32 %s13, 1
        // Predicated region
        $region13: #{tpu_custom_call.1} parent=11 // pred_check
          %p143 = pneg %p60
        $region14: #{tpu_custom_call.1} parent=11 // pred_check_branch
          %145 = sbr.rel (%p143) target = $region16
        $region15: #{tpu_custom_call.1} parent=11 // pred_region
          _
        $region16: #{tpu_custom_call.1} parent=11 // pred_fallthru
          _
        // Predicated region
        $region17: #{tpu_custom_call.1} parent=11 // pred_check
          %p146 = pneg %p81
        $region18: #{tpu_custom_call.1} parent=11 // pred_check_branch
          %148 = sbr.rel (%p146) target = $region20
        $region19: #{tpu_custom_call.1} parent=11 // pred_region
          _
        $region20: #{tpu_custom_call.1} parent=11 // pred_fallthru
          _
        // Predicated region
        $region21: #{tpu_custom_call.1} parent=11 // pred_check
          %p149 = pneg %p102
        $region22: #{tpu_custom_call.1} parent=11 // pred_check_branch
          %151 = sbr.rel (%p149) target = $region24
        $region23: #{tpu_custom_call.1} parent=11 // pred_region
          _
        $region24: #{tpu_custom_call.1} parent=11 // pred_fallthru
          _
      $region12: #{tpu_custom_call.1} parent=5 // pred_fallthru
        _
      %p152 = scmp.lt.s32.totalorder %s13, 2
      // Predicated region
      $region25: #{tpu_custom_call.1} parent=5 // pred_check
        %p153 = pneg %p152
      $region26: #{tpu_custom_call.1} parent=5 // pred_check_branch
        %155 = sbr.rel (%p153) target = $region28
      $region27: #{tpu_custom_call.1} parent=5 // pred_region
        // Predicated region
        $region29: #{tpu_custom_call.1} parent=27 // pred_check
          %p156 = pneg %p33
        $region30: #{tpu_custom_call.1} parent=27 // pred_check_branch
          %158 = sbr.rel (%p156) target = $region32
        $region31: #{tpu_custom_call.1} parent=27 // pred_region
          %s159 = sand.u32 %s23, 1
          %s160 = sand.u32 %s23, 1
          %s161 = smul.addr %s160, 8
          %s162 = scalar_lea.vmem [#allocation2], %s161
          %s163 = smul.addr %s13, 4
          %s164 = scalar_lea.vmem %s0, %s163
          // Predicated region
          $region33: #{tpu_custom_call.1} parent=31 // pred_check
            _
          $region34: #{tpu_custom_call.1} parent=31 // pred_check_branch
            %166 = sbr.rel (0) target = $region36
          $region35: #{tpu_custom_call.1} parent=31 // pred_region
            // Predicated region
            $region37: #{tpu_custom_call.1} parent=35 // pred_check
              _
            $region38: #{tpu_custom_call.1} parent=35 // pred_check_branch
              %168 = sbr.rel target = $region40
            $region39: #{tpu_custom_call.1} parent=35 // pred_region
              // Predicated region
              $region52: #{tpu_custom_call.1} parent=39 // pred_check
                _
              $region53: #{tpu_custom_call.1} parent=39 // pred_check_branch
                %186 = sbr.rel (0) target = $region55
              $region54: #{tpu_custom_call.1} parent=39 // pred_region
                loop: start=0, step=1, limit=1
                $region56: #{tpu_custom_call.1} parent=54 // loop_pre_header
                  _
                $region57: #{tpu_custom_call.1} parent=54 // loop_header
                  %s188 = sphi 0, %s192
                  %p189 = scmp.ge.s32.totalorder %s188, 1
                  %s193 = sphi %s164, %s164
                  %s194 = sphi %s162, %s162
                $region58: #{tpu_custom_call.1} parent=54 // loop_header_branch
                  %191 = sbr.rel (%p189) target = $region62
                $region59: #{tpu_custom_call.1} parent=54 // loop_body
                  _
                $region60: #{tpu_custom_call.1} parent=54 // loop_footer
                  %s192 = sadd.s32 1, %s188
                $region61: #{tpu_custom_call.1} parent=54 // loop_footer_branch
                  %187 = sbr.rel target = $region57
                $region62: #{tpu_custom_call.1} parent=54 // loop_exit
                  _
                %s196 = ssub.s32 16, 1
                loop: start=0, step=1, limit=1
                $region63: #{tpu_custom_call.1} parent=54 // loop_pre_header
                  _
                $region64: #{tpu_custom_call.1} parent=54 // loop_header
                  %s198 = sphi 0, %s202
                  %p199 = scmp.ge.s32.totalorder %s198, 1
                  %s203 = sphi %s164, %s164
                  %s204 = sphi %s162, %s162
                $region65: #{tpu_custom_call.1} parent=54 // loop_header_branch
                  %201 = sbr.rel (%p199) target = $region69
                $region66: #{tpu_custom_call.1} parent=54 // loop_body
                  %v205 = vld [vmem:[%s203] sm:%s196]
                  %206 = vst [vmem:[%s204] sm:%s196] %v205
                  %v207 = vld [vmem:[%s203 + $0x8] sm:%s196]
                  %208 = vst [vmem:[%s204 + $0x4] sm:%s196] %v207
                $region67: #{tpu_custom_call.1} parent=54 // loop_footer
                  %s202 = sadd.s32 1, %s198
                $region68: #{tpu_custom_call.1} parent=54 // loop_footer_branch
                  %197 = sbr.rel target = $region64
                $region69: #{tpu_custom_call.1} parent=54 // loop_exit
                  _
              $region55: #{tpu_custom_call.1} parent=39 // pred_fallthru
                _
            $region40: #{tpu_custom_call.1} parent=35 // pred_fallthru
              _
            // Predicated region
            $region41: #{tpu_custom_call.1} parent=35 // pred_check
              _
            $region42: #{tpu_custom_call.1} parent=35 // pred_check_branch
              %170 = sbr.rel (0) target = $region44
            $region43: #{tpu_custom_call.1} parent=35 // pred_region
              %s172 = ssub.s32 16, 1
              loop: start=0, step=1, limit=1
              $region45: #{tpu_custom_call.1} parent=43 // loop_pre_header
                _
              $region46: #{tpu_custom_call.1} parent=43 // loop_header
                %s174 = sphi 0, %s178
                %p175 = scmp.ge.s32.totalorder %s174, 1
                %s179 = sphi %s164, %s164
                %s180 = sphi %s162, %s162
              $region47: #{tpu_custom_call.1} parent=43 // loop_header_branch
                %177 = sbr.rel (%p175) target = $region51
              $region48: #{tpu_custom_call.1} parent=43 // loop_body
                %v181 = vld [vmem:[%s179] sm:%s172]
                %182 = vst [vmem:[%s180] sm:%s172] %v181
                %v183 = vld [vmem:[%s179 + $0x8] sm:%s172]
                %184 = vst [vmem:[%s180 + $0x4] sm:%s172] %v183
              $region49: #{tpu_custom_call.1} parent=43 // loop_footer
                %s178 = sadd.s32 1, %s174
              $region50: #{tpu_custom_call.1} parent=43 // loop_footer_branch
                %173 = sbr.rel target = $region46
              $region51: #{tpu_custom_call.1} parent=43 // loop_exit
                _
            $region44: #{tpu_custom_call.1} parent=35 // pred_fallthru
              _
          $region36: #{tpu_custom_call.1} parent=31 // pred_fallthru
            _
          %209 = vnop
        $region32: #{tpu_custom_call.1} parent=27 // pred_fallthru
          _
      $region28: #{tpu_custom_call.1} parent=5 // pred_fallthru
        _
      %p210 = scmp.le.s32.totalorder 1, %s13
      %p211 = scmp.lt.s32.totalorder %s13, 3
      %p212 = pnand %p210, %p211
      %p213 = pneg %p212
      // Predicated region
      $region70: #{tpu_custom_call.1} parent=5 // pred_check
        _
      $region71: #{tpu_custom_call.1} parent=5 // pred_check_branch
        %215 = sbr.rel (%p212) target = $region73
      $region72: #{tpu_custom_call.1} parent=5 // pred_region
        %s216 = ssub.s32 %s13, 1
        %s217 = sand.u32 %s26, 1
        %s218 = sand.u32 %s26, 1
        %s219 = smul.addr %s218, 8
        %s220 = scalar_lea.vmem [#allocation2], %s219
        // Predicated region
        $region74: #{tpu_custom_call.1} parent=72 // pred_check
          %p221 = pneg %p39
        $region75: #{tpu_custom_call.1} parent=72 // pred_check_branch
          %223 = sbr.rel (%p221) target = $region77
        $region76: #{tpu_custom_call.1} parent=72 // pred_region
          _
        $region77: #{tpu_custom_call.1} parent=72 // pred_fallthru
          _
        %s224 = sand.u32 %s26, 1
        %s225 = sand.u32 %s26, 1
        %s226 = smul.addr %s225, 8
        %s227 = scalar_lea.vmem [#allocation2], %s226
        %p228 = pneg %p39
        %p229 = pneg %p36
        %p230 = pneg %p60
        %p231 = pneg %p57
        %p232 = pneg %p81
        %p233 = pneg %p78
        %p234 = pneg %p102
        %p235 = pneg %p99
        %p236 = pneg %p128
        %p237 = pneg %p125
        %s238 = sand.u32 %s115, 1
        %s239 = scalar_lea.sflag [#allocation4], %s238
        %s240 = sand.u32 %s115, 1
        %s241 = smul.addr %s240, 8
        %s242 = scalar_lea.vmem [#allocation3], %s241
        %v244 = vld [vmem:[%s1] sm:$0xf]
        %v245 = vld [vmem:[%s1 + $0x4] sm:$0xf]
        %v246 = vld [vmem:[%s1 + $0x8] sm:$0xf]
        %v247 = vld [vmem:[%s1 + $0xc] sm:$0xf]
        %v248 = vld [vmem:[%s1 + $0x10] sm:$0xf]
        %v249 = vld [vmem:[%s1 + $0x14] sm:$0xf]
        %v250 = vld [vmem:[%s1 + $0x18] sm:$0xf]
        %v251 = vld [vmem:[%s1 + $0x1c] sm:$0xf]
        %v252 = vld [vmem:[%s1 + $0x20] sm:$0xf]
        %v253 = vld [vmem:[%s1 + $0x24] sm:$0xf]
        %v254 = vld [vmem:[%s1 + $0x28] sm:$0xf]
        %v255 = vld [vmem:[%s1 + $0x2c] sm:$0xf]
        %v256 = vld [vmem:[%s1 + $0x30] sm:$0xf]
        %v257 = vld [vmem:[%s1 + $0x34] sm:$0xf]
        %v258 = vld [vmem:[%s1 + $0x38] sm:$0xf]
        %v259 = vld [vmem:[%s1 + $0x3c] sm:$0xf]
        %v260 = vld [vmem:[%s220] sm:$0xf]
        %v261 = vld [vmem:[%s220 + $0x4] sm:$0xf]
        %v278 = vunpack.c.l.b16 %v244
        %v279 = vunpack.c.l.b16 %v245
        %v280 = vunpack.c.l.b16 %v246
        %v281 = vunpack.c.l.b16 %v247
        %v282 = vunpack.c.l.b16 %v248
        %v283 = vunpack.c.l.b16 %v249
        %v284 = vunpack.c.l.b16 %v250
        %v285 = vunpack.c.l.b16 %v251
        %v286 = vunpack.c.l.b16 %v252
        %v287 = vunpack.c.l.b16 %v253
        %v288 = vunpack.c.l.b16 %v254
        %v289 = vunpack.c.l.b16 %v255
        %v290 = vunpack.c.l.b16 %v256
        %v291 = vunpack.c.l.b16 %v257
        %v292 = vunpack.c.l.b16 %v258
        %v293 = vunpack.c.l.b16 %v259
        %v294 = vpack.c.b16 %v279, %v278
        %v295 = vpack.c.b16 %v281, %v280
        %v296 = vpack.c.b16 %v283, %v282
        %v297 = vpack.c.b16 %v285, %v284
        %v298 = vpack.c.b16 %v287, %v286
        %v299 = vpack.c.b16 %v289, %v288
        %v300 = vpack.c.b16 %v291, %v290
        %v301 = vpack.c.b16 %v293, %v292
        %v304 = vunpack.c.l.b16 %v260
        %v305 = vunpack.c.l.b16 %v261
        %v306 = vpack.c.b16 %v305, %v304
        %vm308 = vcmask 130048
        %v310 = vsel %vm308, %v294, 0
        %v313 = vsel %vm308, %v295, 0
        %v316 = vsel %vm308, %v296, 0
        %v319 = vsel %vm308, %v297, 0
        %v322 = vsel %vm308, %v298, 0
        %v325 = vsel %vm308, %v299, 0
        %v328 = vsel %vm308, %v300, 0
        %v331 = vsel %vm308, %v301, 0
        %333 = vmatprep.subr.bf16.mxu0 0
        %334 = vmatpush1.bf16.msra.mxu0 0
        %335 = vmatprep.subr.bf16.mxu0 0
        %336 = vmatpush1.bf16.msra.mxu0 0
        %337 = vmatprep.subr.bf16.mxu0 0
        %338 = vmatpush1.bf16.msra.mxu0 0
        %339 = vmatprep.subr.bf16.mxu0 0
        %340 = vmatpush1.bf16.msra.mxu0 0
        %341 = vmatprep.subr.bf16.mxu0 0
        %342 = vmatpush1.bf16.msra.mxu0 0
        %343 = vmatprep.subr.bf16.mxu0 0
        %344 = vmatpush1.bf16.msra.mxu0 0
        %345 = vmatprep.subr.bf16.mxu0 0
        %346 = vmatpush1.bf16.msra.mxu0 0
        %347 = vmatprep.subr.bf16.mxu0 0
        %348 = vmatpush1.bf16.msra.mxu0 %v306
        %349 = vmatprep.subr.bf16.mxu0 0
        %350 = vmatpush2.bf16.msra.mxu0 0
        %351 = vmatprep.subr.bf16.mxu0 0
        %352 = vmatpush2.bf16.msra.mxu0 0
        %353 = vmatprep.subr.bf16.mxu0 0
        %354 = vmatpush2.bf16.msra.mxu0 0
        %355 = vmatprep.subr.bf16.mxu0 0
        %356 = vmatpush2.bf16.msra.mxu0 0
        %357 = vmatprep.subr.bf16.mxu0 0
        %358 = vmatpush2.bf16.msra.mxu0 0
        %359 = vmatprep.subr.bf16.mxu0 0
        %360 = vmatpush2.bf16.msra.mxu0 0
        %361 = vmatprep.subr.bf16.mxu0 0
        %362 = vmatpush2.bf16.msra.mxu0 0
        %363 = vmatprep.subr.bf16.mxu0 0
        %364 = vmatpush2.bf16.msra.mxu0 0
        %365 = vmatprep.mubr.bf16.mxu0 0
        %366 = vmatmul.mubr.bf16.gmra.mxu0 %v310
        %v367 = vpop.f32.mrf.mxu0
        %v368 = vadd.f32 0.0, %v367
        %v369 = vpop.f32.mrf.mxu0
        %v370 = vpop.f32.mrf.mxu0
        %v371 = vadd.f32 0.0, %v370
        %v372 = vpop.f32.mrf.mxu0
        %373 = vmatprep.mubr.bf16.mxu0 0
        %374 = vmatmul.mubr.bf16.gmra.mxu0 %v313
        %v375 = vpop.f32.mrf.mxu0
        %v376 = vadd.f32 0.0, %v375
        %v377 = vpop.f32.mrf.mxu0
        %v378 = vpop.f32.mrf.mxu0
        %v379 = vadd.f32 0.0, %v378
        %v380 = vpop.f32.mrf.mxu0
        %381 = vmatprep.mubr.bf16.mxu0 0
        %382 = vmatmul.mubr.bf16.gmra.mxu0 %v316
        %v383 = vpop.f32.mrf.mxu0
        %v384 = vadd.f32 0.0, %v383
        %v385 = vpop.f32.mrf.mxu0
        %v386 = vpop.f32.mrf.mxu0
        %v387 = vadd.f32 0.0, %v386
        %v388 = vpop.f32.mrf.mxu0
        %389 = vmatprep.mubr.bf16.mxu0 0
        %390 = vmatmul.mubr.bf16.gmra.mxu0 %v319
        %v391 = vpop.f32.mrf.mxu0
        %v392 = vadd.f32 0.0, %v391
        %v393 = vpop.f32.mrf.mxu0
        %v394 = vpop.f32.mrf.mxu0
        %v395 = vadd.f32 0.0, %v394
        %v396 = vpop.f32.mrf.mxu0
        %397 = vmatprep.mubr.bf16.mxu0 0
        %398 = vmatmul.mubr.bf16.gmra.mxu0 %v322
        %v399 = vpop.f32.mrf.mxu0
        %v400 = vadd.f32 0.0, %v399
        %v401 = vpop.f32.mrf.mxu0
        %v402 = vpop.f32.mrf.mxu0
        %v403 = vadd.f32 0.0, %v402
        %v404 = vpop.f32.mrf.mxu0
        %405 = vmatprep.mubr.bf16.mxu0 0
        %406 = vmatmul.mubr.bf16.gmra.mxu0 %v325
        %v407 = vpop.f32.mrf.mxu0
        %v408 = vadd.f32 0.0, %v407
        %v409 = vpop.f32.mrf.mxu0
        %v410 = vpop.f32.mrf.mxu0
        %v411 = vadd.f32 0.0, %v410
        %v412 = vpop.f32.mrf.mxu0
        %413 = vmatprep.mubr.bf16.mxu0 0
        %414 = vmatmul.mubr.bf16.gmra.mxu0 %v328
        %v415 = vpop.f32.mrf.mxu0
        %v416 = vadd.f32 0.0, %v415
        %v417 = vpop.f32.mrf.mxu0
        %v418 = vpop.f32.mrf.mxu0
        %v419 = vadd.f32 0.0, %v418
        %v420 = vpop.f32.mrf.mxu0
        %421 = vmatprep.mubr.bf16.mxu0 0
        %422 = vmatmul.mubr.bf16.gmra.mxu0 %v331
        %v423 = vpop.f32.mrf.mxu0
        %v424 = vadd.f32 0.0, %v423
        %v425 = vpop.f32.mrf.mxu0
        %v426 = vpop.f32.mrf.mxu0
        %v427 = vadd.f32 0.0, %v426
        %v428 = vpop.f32.mrf.mxu0
        %429 = vdwg.mxu0
        %v430 = vxor.u32 %v368, 2147483648
        %v431 = vxor.u32 %v371, 2147483648
        %v432 = vxor.u32 %v376, 2147483648
        %v433 = vxor.u32 %v379, 2147483648
        %v434 = vxor.u32 %v384, 2147483648
        %v435 = vxor.u32 %v387, 2147483648
        %v436 = vxor.u32 %v392, 2147483648
        %v437 = vxor.u32 %v395, 2147483648
        %v438 = vxor.u32 %v400, 2147483648
        %v439 = vxor.u32 %v403, 2147483648
        %v440 = vxor.u32 %v408, 2147483648
        %v441 = vxor.u32 %v411, 2147483648
        %v442 = vxor.u32 %v416, 2147483648
        %v443 = vxor.u32 %v419, 2147483648
        %v444 = vxor.u32 %v424, 2147483648
        %v445 = vxor.u32 %v427, 2147483648
        %v446 = vmul.f32 %v430, 1.442695
        %v447 = vpow.pop %v446
        %v448 = vmul.f32 %v431, 1.442695
        %v449 = vpow.pop %v448
        %v450 = vmul.f32 %v432, 1.442695
        %v451 = vpow.pop %v450
        %v452 = vmul.f32 %v433, 1.442695
        %v453 = vpow.pop %v452
        %v454 = vmul.f32 %v434, 1.442695
        %v455 = vpow.pop %v454
        %v456 = vmul.f32 %v435, 1.442695
        %v457 = vpow.pop %v456
        %v458 = vmul.f32 %v436, 1.442695
        %v459 = vpow.pop %v458
        %v460 = vmul.f32 %v437, 1.442695
        %v461 = vpow.pop %v460
        %v462 = vmul.f32 %v438, 1.442695
        %v463 = vpow.pop %v462
        %v464 = vmul.f32 %v439, 1.442695
        %v465 = vpow.pop %v464
        %v466 = vmul.f32 %v440, 1.442695
        %v467 = vpow.pop %v466
        %v468 = vmul.f32 %v441, 1.442695
        %v469 = vpow.pop %v468
        %v470 = vmul.f32 %v442, 1.442695
        %v471 = vpow.pop %v470
        %v472 = vmul.f32 %v443, 1.442695
        %v473 = vpow.pop %v472
        %v474 = vmul.f32 %v444, 1.442695
        %v475 = vpow.pop %v474
        %v476 = vmul.f32 %v445, 1.442695
        %v477 = vpow.pop %v476
        %v478 = vadd.f32 %v447, 1.0
        %v479 = vadd.f32 %v449, 1.0
        %v480 = vadd.f32 %v451, 1.0
        %v481 = vadd.f32 %v453, 1.0
        %v482 = vadd.f32 %v455, 1.0
        %v483 = vadd.f32 %v457, 1.0
        %v484 = vadd.f32 %v459, 1.0
        %v485 = vadd.f32 %v461, 1.0
        %v486 = vadd.f32 %v463, 1.0
        %v487 = vadd.f32 %v465, 1.0
        %v488 = vadd.f32 %v467, 1.0
        %v489 = vadd.f32 %v469, 1.0
        %v490 = vadd.f32 %v471, 1.0
        %v491 = vadd.f32 %v473, 1.0
        %v492 = vadd.f32 %v475, 1.0
        %v493 = vadd.f32 %v477, 1.0
        %v494 = vrcp.pop %v478
        %v495 = vmul.f32 1.0, %v494
        %v496 = vrcp.pop %v479
        %v497 = vmul.f32 1.0, %v496
        %v498 = vrcp.pop %v480
        %v499 = vmul.f32 1.0, %v498
        %v500 = vrcp.pop %v481
        %v501 = vmul.f32 1.0, %v500
        %v502 = vrcp.pop %v482
        %v503 = vmul.f32 1.0, %v502
        %v504 = vrcp.pop %v483
        %v505 = vmul.f32 1.0, %v504
        %v506 = vrcp.pop %v484
        %v507 = vmul.f32 1.0, %v506
        %v508 = vrcp.pop %v485
        %v509 = vmul.f32 1.0, %v508
        %v510 = vrcp.pop %v486
        %v511 = vmul.f32 1.0, %v510
        %v512 = vrcp.pop %v487
        %v513 = vmul.f32 1.0, %v512
        %v514 = vrcp.pop %v488
        %v515 = vmul.f32 1.0, %v514
        %v516 = vrcp.pop %v489
        %v517 = vmul.f32 1.0, %v516
        %v518 = vrcp.pop %v490
        %v519 = vmul.f32 1.0, %v518
        %v520 = vrcp.pop %v491
        %v521 = vmul.f32 1.0, %v520
        %v522 = vrcp.pop %v492
        %v523 = vmul.f32 1.0, %v522
        %v524 = vrcp.pop %v493
        %v525 = vmul.f32 1.0, %v524
        %v526 = vld [vmem:[%s2] sm:$0xf]
        %v527 = vpack.c.bf16 %v497, %v495
        %v528 = vpack.c.bf16 %v501, %v499
        %v529 = vpack.c.bf16 %v505, %v503
        %v530 = vpack.c.bf16 %v509, %v507
        %v531 = vpack.c.bf16 %v513, %v511
        %v532 = vpack.c.bf16 %v517, %v515
        %v533 = vpack.c.bf16 %v521, %v519
        %v534 = vpack.c.bf16 %v525, %v523
        %v535 = vld [vmem:[%s3] sm:$0xff]
        %537 = vset.pattern.permute.xlu0 0
        %538 = vperm.xlu0 %537, %v535
        %v539 = vpop.permute.xlu0 %538
        %541 = vmatprep.subr.bf16.mxu0 0
        %542 = vmatpush1.bf16.msra.mxu0 %v534
        %543 = vmatprep.subr.bf16.mxu0 0
        %544 = vmatpush1.bf16.msra.mxu0 %v533
        %545 = vmatprep.subr.bf16.mxu0 0
        %546 = vmatpush1.bf16.msra.mxu0 %v532
        %547 = vmatprep.subr.bf16.mxu0 0
        %548 = vmatpush1.bf16.msra.mxu0 %v531
        %549 = vmatprep.subr.bf16.mxu0 0
        %550 = vmatpush1.bf16.msra.mxu0 %v530
        %551 = vmatprep.subr.bf16.mxu0 0
        %552 = vmatpush1.bf16.msra.mxu0 %v529
        %553 = vmatprep.subr.bf16.mxu0 0
        %554 = vmatpush1.bf16.msra.mxu0 %v528
        %555 = vmatprep.subr.bf16.mxu0 0
        %556 = vmatpush1.bf16.msra.mxu0 %v527
        %557 = vmatprep.subr.bf16.mxu0 0
        %558 = vmatpush2.bf16.msra.mxu0 0
        %559 = vmatprep.subr.bf16.mxu0 0
        %560 = vmatpush2.bf16.msra.mxu0 0
        %561 = vmatprep.subr.bf16.mxu0 0
        %562 = vmatpush2.bf16.msra.mxu0 0
        %563 = vmatprep.subr.bf16.mxu0 0
        %564 = vmatpush2.bf16.msra.mxu0 0
        %565 = vmatprep.subr.bf16.mxu0 0
        %566 = vmatpush2.bf16.msra.mxu0 0
        %567 = vmatprep.subr.bf16.mxu0 0
        %568 = vmatpush2.bf16.msra.mxu0 0
        %569 = vmatprep.subr.bf16.mxu0 0
        %570 = vmatpush2.bf16.msra.mxu0 0
        %571 = vmatprep.subr.bf16.mxu0 0
        %572 = vmatpush2.bf16.msra.mxu0 0
        %573 = vmatprep.mubr.bf16.mxu0 0
        %574 = vmatmul.mubr.bf16.gmra.mxu0 %v526
        %v575 = vpop.f32.mrf.mxu0
        %v576 = vadd.f32 %v539, %v575
        %v577 = vpop.f32.mrf.mxu0
        %v578 = vpop.f32.mrf.mxu0
        %v579 = vpop.f32.mrf.mxu0
        %580 = vdwg.mxu0
        %581 = vst [vmem:[%s242] sm:$0xff] %v576
        %s582 = sand.u32 %s115, 1
        %s583 = scalar_lea.sflag [#allocation4], %s582
        %s584 = sand.u32 %s115, 1
        %s585 = smul.addr %s584, 8
        %s586 = scalar_lea.vmem [#allocation3], %s585
        // Predicated region
        $region78: #{tpu_custom_call.1} parent=72 // pred_check
          %p587 = pneg %p125
        $region79: #{tpu_custom_call.1} parent=72 // pred_check_branch
          %589 = sbr.rel (%p587) target = $region81
        $region80: #{tpu_custom_call.1} parent=72 // pred_region
          %s591 = ssub.s32 128, 128
          %592 = vsyncadd %s583, %s591
          %s593 = smul.addr %s18, 128
          %s594 = scalar_lea.hbm %s4, %s593
          %s596 = sshll.u32 %s586, 4
          %s597 = int_to_ptr.vmem [resolvable:$true] %s596
          %599 = dma.vmem_to_hbm [thread:$0]  %s597, 128, %s594, %s583
        $region81: #{tpu_custom_call.1} parent=72 // pred_fallthru
          _
      $region73: #{tpu_custom_call.1} parent=5 // pred_fallthru
        _
      %p600 = scmp.le.s32.totalorder 2, %s13
      // Predicated region
      $region82: #{tpu_custom_call.1} parent=5 // pred_check
        %p601 = pneg %p600
      $region83: #{tpu_custom_call.1} parent=5 // pred_check_branch
        %603 = sbr.rel (%p601) target = $region85
      $region84: #{tpu_custom_call.1} parent=5 // pred_region
        %s604 = ssub.s32 %s13, 2
        // Predicated region
        $region86: #{tpu_custom_call.1} parent=84 // pred_check
          %p605 = pneg %p131
        $region87: #{tpu_custom_call.1} parent=84 // pred_check_branch
          %607 = sbr.rel (%p605) target = $region89
        $region88: #{tpu_custom_call.1} parent=84 // pred_region
          %s608 = sand.u32 %s116, 1
          %s609 = scalar_lea.sflag [#allocation4], %s608
          %s610 = sand.u32 %s116, 1
          %s611 = smul.addr %s610, 8
          %s612 = scalar_lea.vmem [#allocation3], %s611
          %613 = dma.done %s609, 128
        $region89: #{tpu_custom_call.1} parent=84 // pred_fallthru
          _
      $region85: #{tpu_custom_call.1} parent=5 // pred_fallthru
        _
    $region6: #{tpu_custom_call.1} parent=1 // loop_footer
      %s17 = sadd.s32 1, %s13
    $region7: #{tpu_custom_call.1} parent=1 // loop_footer_branch
      %12 = sbr.rel target = $region3
    $region8: #{tpu_custom_call.1} parent=1 // loop_exit
      _
    %614 = vsyncpa [#allocation4], 1
    %s615 = scalar_lea.sflag [#allocation4], 1
    %616 = vsyncpa %s615, 1

</llo_original>
